<compile_context>
chip_gen: v5e
topology: v5e:2x2
jax: 0.10.0
libtpu: 0.0.40
codegen_flags: <defaults>
</compile_context>

<pallas_src>
import functools
import math

import jax
import jax.numpy as jnp
from jax.experimental import pallas as pl
from jax.experimental.pallas import tpu as pltpu

_CW = 512  # inner accumulator width: 4 independent 128-lane columns (VALU ILP)


def _round_up(x, m):
    return ((x + m - 1) // m) * m


def _default_parallel():
    """2 spatial chunks on multi-TensorCore chips (v7x), else 1."""
    try:
        kind = jax.devices()[0].device_kind.lower()
    except Exception:
        return 1
    return 2 if "v7" in kind else 1


def _fori(lo, hi, body, init, unroll):
    try:
        return jax.lax.fori_loop(lo, hi, body, init, unroll=unroll)
    except TypeError:  # very old jax without `unroll`
        return jax.lax.fori_loop(lo, hi, body, init)


def _bce_partial_kernel(p_ref, t_ref, o_ref, acc_ref, *, tile_s, k_steps,
                        n_tiles, cw, spatial_size, needs_mask, needs_skip,
                        unroll):
    """One (parallel-chunk p, reduction-step k) grid point.

    p_ref/t_ref: (R, tile_s) logits / targets for this spatial tile (VMEM).
    acc_ref:     (R, cw) f32 lane-dense running sum (VMEM scratch).
    o_ref:       (1, R, cw) partial sums for chunk p (written at last k).
    """
    p = pl.program_id(0)
    k = pl.program_id(1)
    t = p * k_steps + k                        # logical spatial-tile index
    t_eff = jnp.minimum(t, n_tiles - 1)        # matches the clamped index_map
    tile_start = t_eff * tile_s

    @pl.when(k == 0)
    def _():
        acc_ref[...] = jnp.zeros_like(acc_ref)

    n_inner = tile_s // cw

    def chunk_loss(j, masked):
        idx = pl.ds(pl.multiple_of(j * cw, cw), cw)
        x = p_ref[:, idx].astype(jnp.float32)
        z = t_ref[:, idx].astype(jnp.float32)
        # nn.BCEWithLogitsLoss(reduction='none'), numerically stable form:
        #   max(x, 0) - x*z + log1p(exp(-|x|))
        l = jnp.maximum(x, 0.0) - x * z + jnp.log1p(jnp.exp(-jnp.abs(x)))
        if masked:
            # Zero out padded/OOB tail columns (global column index >= S).
            col = tile_start + j * cw + jax.lax.broadcasted_iota(
                jnp.int32, l.shape, 1)
            l = jnp.where(col < spatial_size, l, 0.0)
        return l

    def accumulate(masked):
        def body(j, carry):
            return carry + chunk_loss(j, masked)
        carry = _fori(0, n_inner, body,
                      jnp.zeros(acc_ref.shape, jnp.float32), unroll)
        acc_ref[...] += carry

    def run_tile():
        if needs_mask:
            overruns = (tile_start + tile_s) > spatial_size

            @pl.when(overruns)
            def _():
                accumulate(masked=True)

            @pl.when(jnp.logical_not(overruns))
            def _():
                accumulate(masked=False)
        else:
            accumulate(masked=False)

    if needs_skip:
        # Grid steps past the last valid tile re-read a clamped block; skip.
        @pl.when(t < n_tiles)
        def _():
            run_tile()
    else:
        run_tile()

    @pl.when(k == k_steps - 1)
    def _():
        o_ref[...] = acc_ref[...][None]


def bce_per_row_sum(predict_2d, target_2d, *, target_block_bytes=4 << 20,
                    parallel=None):
    """predict_2d, target_2d: (R, S) float. Returns (R,) f32 spatial sums of
    BCEWithLogits(reduction='none')."""
    R, S = predict_2d.shape
    if parallel is None:
        parallel = _default_parallel()
    itemsize = jnp.dtype(predict_2d.dtype).itemsize

    # --- tile sizing (bytes-based; kernel is HBM-bound) -------------------
    # Target ~target_block_bytes of each input per grid step so DMA time
    # dwarfs the fixed per-step overhead.  tile_s is a multiple of the inner
    # chunk width so the in-kernel fold needs no remainder path.
    cols_target = max(_CW, (target_block_bytes // max(1, R * itemsize))
                      // _CW * _CW)
    tile_s = min(cols_target, _round_up(S, _CW))
    n_tiles = pl.cdiv(S, tile_s)              # tiles containing valid columns
    parallel = max(1, min(int(parallel), n_tiles))
    k_steps = pl.cdiv(n_tiles, parallel)

    needs_mask = (n_tiles * tile_s != S)          # last tile is ragged
    needs_skip = (parallel * k_steps != n_tiles)  # grid has spare steps

    n_inner = tile_s // _CW
    unroll = math.gcd(n_inner, 4)

    kernel = functools.partial(
        _bce_partial_kernel,
        tile_s=tile_s, k_steps=k_steps, n_tiles=n_tiles, cw=_CW,
        spatial_size=S, needs_mask=needs_mask, needs_skip=needs_skip,
        unroll=unroll)

    # Clamp the block index so spare grid steps re-read the last valid tile
    # instead of issuing a fully out-of-bounds DMA (kernel skips them).
    def col_block(p, k):
        return (0, jnp.minimum(p * k_steps + k, n_tiles - 1))

    block_bytes = R * tile_s * itemsize
    # 2 inputs x 2 pipeline buffers + outputs/scratch, with headroom.  Stays
    # under v7x's 64 MiB physical VMEM and above v5e's 16 MiB default cap.
    vmem_limit = int(min(max(5 * block_bytes + (4 << 20), 32 << 20), 48 << 20))

    cost = pl.CostEstimate(
        flops=7 * R * S,
        transcendentals=2 * R * S,
        bytes_accessed=2 * R * S * itemsize + parallel * R * _CW * 4)

    partials = pl.pallas_call(
        kernel,
        out_shape=jax.ShapeDtypeStruct((parallel, R, _CW), jnp.float32),
        grid_spec=pltpu.PrefetchScalarGridSpec(
            num_scalar_prefetch=0,
            grid=(parallel, k_steps),
            in_specs=[
                pl.BlockSpec((R, tile_s), col_block),
                pl.BlockSpec((R, tile_s), col_block),
            ],
            out_specs=pl.BlockSpec((1, R, _CW), lambda p, k: (p, 0, 0)),
            scratch_shapes=[pltpu.VMEM((R, _CW), jnp.float32)],
        ),
        compiler_params=pltpu.CompilerParams(
            dimension_semantics=("parallel", "arbitrary"),
            vmem_limit_bytes=vmem_limit),
        cost_estimate=cost,
    )(predict_2d, target_2d)

    # One tiny cross-lane / cross-chunk reduce, done in plain JAX.
    return jnp.sum(partials, axis=(0, 2))     # (R,)


def ce_loss_4mots(predict, target, *, num_classes=3, ignore_index=None):
    """JAX/Pallas equivalent of CELoss4MOTS.forward (no learnable params)."""
    assert predict.shape == target.shape, "predict & target shape do not match"
    N, C, D, H, W = predict.shape
    S = D * H * W

    p2 = predict.reshape(N * C, S)
    t2 = target.reshape(N * C, S)
    row_sum = bce_per_row_sum(p2, t2)                       # (N*C,)
    per = (row_sum / jnp.float32(S)).reshape(N, C)          # mean over [1,2,3]

    # Sample-validity mask per class: target[:, i, 0, 0, 0] != -1
    valid = target[:, :, 0, 0, 0] != -1.0                   # (N, C) bool

    cls_sum = jnp.sum(jnp.where(valid, per, 0.0), axis=0)   # (C,)
    cls_cnt = jnp.sum(valid, axis=0).astype(jnp.float32)    # (C,)
    cls_avg = cls_sum / cls_cnt                              # 0/0 -> NaN (torch)

    keep = [i for i in range(num_classes) if i != ignore_index]
    total = cls_avg[jnp.array(keep, dtype=jnp.int32)]
    finite = total == total                                  # NaN filter
    return jnp.sum(jnp.where(finite, total, 0.0)) / jnp.sum(finite)


def ce_loss_4mots_ref(predict, target, *, num_classes=3, ignore_index=None):
    """Pure-JAX reference mirroring the PyTorch module."""
    x = predict.astype(jnp.float32)
    z = target.astype(jnp.float32)
    loss = jnp.maximum(x, 0.0) - x * z + jnp.log1p(jnp.exp(-jnp.abs(x)))
    per = jnp.mean(loss, axis=(2, 3, 4))                    # (N, C)
    valid = target[:, :, 0, 0, 0] != -1.0
    cls_avg = jnp.sum(jnp.where(valid, per, 0.0), axis=0) / jnp.sum(
        valid, axis=0).astype(jnp.float32)
    keep = [i for i in range(num_classes) if i != ignore_index]
    total = cls_avg[jnp.array(keep, dtype=jnp.int32)]
    finite = total == total
    return jnp.sum(jnp.where(finite, total, 0.0)) / jnp.sum(finite)


if __name__ == "__main__":
    key = jax.random.PRNGKey(0)
    k1, k2 = jax.random.split(key)

    N, C, D, H, W = 2, 3, 4, 16, 16        # num_classes = 3 -> C = 3
    predict = jax.random.normal(k1, (N, C, D, H, W), dtype=jnp.float32)
    target = jax.random.bernoulli(k2, 0.5, (N, C, D, H, W)).astype(jnp.float32)
    # Mark one (sample, class) volume as "invalid" (-1) to exercise the mask.
    target = target.at[1, 2].set(-1.0)

    out = jax.block_until_ready(ce_loss_4mots(predict, target, num_classes=3))
    ref = ce_loss_4mots_ref(predict, target, num_classes=3)
    assert jnp.allclose(out, ref, rtol=1e-4, atol=1e-6), (out, ref)

    # Also exercise a non-128-divisible spatial size (ragged-tail mask path,
    # no wrapper-side padding).
    D2, H2, W2 = 3, 10, 13                 # S = 390, not a multiple of 128
    p_odd = jax.random.normal(k1, (N, C, D2, H2, W2), dtype=jnp.float32)
    t_odd = jax.random.bernoulli(k2, 0.5, (N, C, D2, H2, W2)).astype(jnp.float32)
    out2 = jax.block_until_ready(ce_loss_4mots(p_odd, t_odd))
    ref2 = ce_loss_4mots_ref(p_odd, t_odd)
    assert jnp.allclose(out2, ref2, rtol=1e-4, atol=1e-6), (out2, ref2)

    print("KERNEL_OK")
</pallas_src>

<mosaic_0001>
module attributes {stable_mosaic.version = 11 : i64} {
  func.func @_bce_partial_kernel(%arg0: i32, %arg1: i32, %arg2: memref<6x1024xf32, #tpu.memory_space<vmem>>, %arg3: memref<6x1024xf32, #tpu.memory_space<vmem>>, %arg4: memref<1x6x512xf32, #tpu.memory_space<vmem>>, %arg5: memref<6x512xf32, #tpu.memory_space<vmem>>) attributes {dimension_semantics = [#tpu.dimension_semantics<parallel>, #tpu.dimension_semantics<arbitrary>], iteration_bounds = array<i64: 1, 1>, scalar_prefetch = 0 : i64, scratch_operands = 1 : i64, tpu.core_type = #tpu.core_type<tc>, window_params = [{transform_indices = @transform_0, window_bounds = array<i64: 6, 1024>}, {transform_indices = @transform_1, window_bounds = array<i64: 6, 1024>}, {transform_indices = @transform_2, window_bounds = array<i64: 1, 6, 512>}]} {
    %c0_i32 = arith.constant 0 : i32
    %0 = arith.cmpi eq, %arg1, %c0_i32 : i32
    %1 = arith.extui %0 : i1 to i32
    %c0_i32_0 = arith.constant 0 : i32
    %2 = arith.cmpi ne, %1, %c0_i32_0 : i32
    scf.if %2 {
      %cst_16 = arith.constant 0.000000e+00 : f32
      %44 = vector.broadcast %cst_16 : f32 to vector<6x512xf32>
      %c0_17 = arith.constant 0 : index
      %c0_18 = arith.constant 0 : index
      %45 = vector.load %arg5[%c0_17, %c0_18] : memref<6x512xf32, #tpu.memory_space<vmem>>, vector<6x512xf32>
      tpu.vector_store %arg5[%c0_17, %c0_18], %44 {strides = array<i32>} : memref<6x512xf32, #tpu.memory_space<vmem>>, vector<6x512xf32>,
    } else {
    }
    %cst = arith.constant 0.000000e+00 : f32
    %3 = vector.broadcast %cst : f32 to vector<6x512xf32>
    %c0_i32_1 = arith.constant 0 : i32
    %c512_i32 = arith.constant 512 : i32
    %4 = arith.muli %c0_i32_1, %c512_i32 : i32
    %5 = tpu.assume_multiple %4, 512 : i32
    %c0 = arith.constant 0 : index
    %6 = arith.index_cast %5 : i32 to index
    %7 = vector.load %arg2[%c0, %6] : memref<6x1024xf32, #tpu.memory_space<vmem>>, vector<6x512xf32>
    %c0_2 = arith.constant 0 : index
    %8 = arith.index_cast %5 : i32 to index
    %9 = vector.load %arg3[%c0_2, %8] : memref<6x1024xf32, #tpu.memory_space<vmem>>, vector<6x512xf32>
    %cst_3 = arith.constant 0.000000e+00 : f32
    %10 = vector.broadcast %cst_3 : f32 to vector<6x512xf32>
    %11 = arith.maximumf %7, %10 : vector<6x512xf32>
    %12 = arith.mulf %7, %9 : vector<6x512xf32>
    %13 = arith.subf %11, %12 : vector<6x512xf32>
    %14 = math.absf %7 : vector<6x512xf32>
    %cst_4 = arith.constant 0.000000e+00 : f32
    %15 = vector.broadcast %cst_4 : f32 to vector<6x512xf32>
    %16 = arith.subf %15, %14 : vector<6x512xf32>
    %17 = math.exp %16 : vector<6x512xf32>
    %18 = math.log1p %17 : vector<6x512xf32>
    %19 = arith.addf %13, %18 : vector<6x512xf32>
    %20 = arith.addf %3, %19 : vector<6x512xf32>
    %c1_i32 = arith.constant 1 : i32
    %c512_i32_5 = arith.constant 512 : i32
    %21 = arith.muli %c1_i32, %c512_i32_5 : i32
    %22 = tpu.assume_multiple %21, 512 : i32
    %c0_6 = arith.constant 0 : index
    %23 = arith.index_cast %22 : i32 to index
    %24 = vector.load %arg2[%c0_6, %23] : memref<6x1024xf32, #tpu.memory_space<vmem>>, vector<6x512xf32>
    %c0_7 = arith.constant 0 : index
    %25 = arith.index_cast %22 : i32 to index
    %26 = vector.load %arg3[%c0_7, %25] : memref<6x1024xf32, #tpu.memory_space<vmem>>, vector<6x512xf32>
    %cst_8 = arith.constant 0.000000e+00 : f32
    %27 = vector.broadcast %cst_8 : f32 to vector<6x512xf32>
    %28 = arith.maximumf %24, %27 : vector<6x512xf32>
    %29 = arith.mulf %24, %26 : vector<6x512xf32>
    %30 = arith.subf %28, %29 : vector<6x512xf32>
    %31 = math.absf %24 : vector<6x512xf32>
    %cst_9 = arith.constant 0.000000e+00 : f32
    %32 = vector.broadcast %cst_9 : f32 to vector<6x512xf32>
    %33 = arith.subf %32, %31 : vector<6x512xf32>
    %34 = math.exp %33 : vector<6x512xf32>
    %35 = math.log1p %34 : vector<6x512xf32>
    %36 = arith.addf %30, %35 : vector<6x512xf32>
    %37 = arith.addf %20, %36 : vector<6x512xf32>
    %c2_i32 = arith.constant 2 : i32
    %c0_10 = arith.constant 0 : index
    %c0_11 = arith.constant 0 : index
    %38 = vector.load %arg5[%c0_10, %c0_11] : memref<6x512xf32, #tpu.memory_space<vmem>>, vector<6x512xf32>
    %39 = arith.addf %38, %37 : vector<6x512xf32>
    %c0_12 = arith.constant 0 : index
    %c0_13 = arith.constant 0 : index
    %40 = vector.load %arg5[%c0_12, %c0_13] : memref<6x512xf32, #tpu.memory_space<vmem>>, vector<6x512xf32>
    tpu.vector_store %arg5[%c0_12, %c0_13], %39 {strides = array<i32>} : memref<6x512xf32, #tpu.memory_space<vmem>>, vector<6x512xf32>,
    %c0_i32_14 = arith.constant 0 : i32
    %41 = arith.cmpi eq, %arg1, %c0_i32_14 : i32
    %42 = arith.extui %41 : i1 to i32
    %c0_i32_15 = arith.constant 0 : i32
    %43 = arith.cmpi ne, %42, %c0_i32_15 : i32
    scf.if %43 {
      %c0_16 = arith.constant 0 : index
      %c0_17 = arith.constant 0 : index
      %44 = vector.load %arg5[%c0_16, %c0_17] : memref<6x512xf32, #tpu.memory_space<vmem>>, vector<6x512xf32>
      %45 = vector.shape_cast %44 : vector<6x512xf32> to vector<1x6x512xf32>
      %c0_18 = arith.constant 0 : index
      %c0_19 = arith.constant 0 : index
      %c0_20 = arith.constant 0 : index
      %46 = vector.load %arg4[%c0_18, %c0_19, %c0_20] : memref<1x6x512xf32, #tpu.memory_space<vmem>>, vector<1x6x512xf32>
      tpu.vector_store %arg4[%c0_18, %c0_19, %c0_20], %45 {strides = array<i32>} : memref<1x6x512xf32, #tpu.memory_space<vmem>>, vector<1x6x512xf32>,
    } else {
    }
    return
  }
  func.func @transform_0(%arg0: i32, %arg1: i32) -> (i32, i32) {
    %c1_i32 = arith.constant 1 : i32
    %0 = arith.muli %arg0, %c1_i32 : i32
    %1 = arith.addi %0, %arg1 : i32
    %c0_i32 = arith.constant 0 : i32
    %2 = arith.minsi %1, %c0_i32 : i32
    %c0_i32_0 = arith.constant 0 : i32
    %c0_i32_1 = arith.constant 0 : i32
    return %c0_i32_0, %2 : i32, i32
  }
  func.func @transform_1(%arg0: i32, %arg1: i32) -> (i32, i32) {
    %c1_i32 = arith.constant 1 : i32
    %0 = arith.muli %arg0, %c1_i32 : i32
    %1 = arith.addi %0, %arg1 : i32
    %c0_i32 = arith.constant 0 : i32
    %2 = arith.minsi %1, %c0_i32 : i32
    %c0_i32_0 = arith.constant 0 : i32
    %c0_i32_1 = arith.constant 0 : i32
    return %c0_i32_0, %2 : i32, i32
  }
  func.func @transform_2(%arg0: i32, %arg1: i32) -> (i32, i32, i32) {
    %c0_i32 = arith.constant 0 : i32
    %c0_i32_0 = arith.constant 0 : i32
    %c0_i32_1 = arith.constant 0 : i32
    return %arg0, %c0_i32, %c0_i32_0 : i32, i32, i32
  }
}

</mosaic_0001>

<llo_original>
// kernel: tpu_custom_call.1
$region0: #{tpu_custom_call.1}
  #allocation0 [shape = 'u32[]', space=smem, size = 0x4, offset = 0x4, fixed_abs, tag = 'smem constant byte address 0x4 - core index']
  #allocation1 [shape = 'u32[72,128]{1,0:T(1,128)}', space=vmem, size = 0x9000, scoped, tag = 'internal scratch']
  #allocation2 [shape = 'f32[6,512]{1,0:T(8,128)}', space=vmem, size = 0x4000, scoped, tag = 'scratch operand']
  %s0 = inlined_call_operand.hbm [shape: f32[6,1024], index: 0, kind: input, shape index: {}]
  %s1 = inlined_call_operand.hbm [shape: f32[6,1024], index: 1, kind: input, shape index: {}]
  %s2 = inlined_call_operand.vmem [shape: f32[1,6,512], index: 2, kind: output, shape index: {}]
  %s3 = sld [smem:[#allocation0]]
  $region34: #{tpu_custom_call.1} parent=0
    _
  %s5 = ssub.s32 1, %s3
  %s6 = scalar_select 0, %s5, %s3
  $region1: #{tpu_custom_call.1} parent=0
    #allocation3 [shape = 'u8[32768]{0}', space=vmem, size = 0x8000, scoped, tag = 'input window, operand 0, single buffered']
    #allocation4 [shape = 's32[1]{0}', space=sflag, size = 0x4, scoped, tag = 'scoped memory for tpu_custom_call.1']
    #allocation5 [shape = 'u8[32768]{0}', space=vmem, size = 0x8000, scoped, tag = 'input window, operand 1, single buffered']
    #allocation6 [shape = 's32[1]{0}', space=sflag, size = 0x4, scoped, tag = 'scoped memory for tpu_custom_call.1']
    %7 = vsyncpa [#allocation4], 0
    %8 = vsyncpa [#allocation6], 0
    // Predicated region
    $region2: #{tpu_custom_call.1} parent=1 // pred_check
      _
    $region3: #{tpu_custom_call.1} parent=1 // pred_check_branch
      %10 = sbr.rel (0) target = $region5
    $region4: #{tpu_custom_call.1} parent=1 // pred_region
      %s11 = sadd.s32 0, 0
      %p12 = scmp.lt.s32.totalorder %s11, 0
      %s13 = scalar_select %p12, %s11, 0
      %s14 = smul.u32 8, %s13
      %16 = vsyncadd [#allocation4], 0
      %s17 = smul.addr %s14, 8
      %s18 = scalar_lea.hbm %s0, %s17
      %s20 = sshll.u32 %s18, 4
      %s21 = int_to_ptr.hbm [resolvable:$true] %s20
      %s22 = sshll.u32 [#allocation3], 4
      %s23 = int_to_ptr.vmem [resolvable:$true] %s22
      %25 = dma.hbm_to_vmem [thread:$0]  %s21, 1024, %s23, [#allocation4]
    $region5: #{tpu_custom_call.1} parent=1 // pred_fallthru
      _
    // Predicated region
    $region6: #{tpu_custom_call.1} parent=1 // pred_check
      _
    $region7: #{tpu_custom_call.1} parent=1 // pred_check_branch
      %27 = sbr.rel (0) target = $region9
    $region8: #{tpu_custom_call.1} parent=1 // pred_region
      %s28 = sadd.s32 0, 0
      %p29 = scmp.lt.s32.totalorder %s28, 0
      %s30 = scalar_select %p29, %s28, 0
      %s31 = smul.u32 8, %s30
      %33 = vsyncadd [#allocation6], 0
      %s34 = smul.addr %s31, 8
      %s35 = scalar_lea.hbm %s1, %s34
      %s37 = sshll.u32 %s35, 4
      %s38 = int_to_ptr.hbm [resolvable:$true] %s37
      %s39 = sshll.u32 [#allocation5], 4
      %s40 = int_to_ptr.vmem [resolvable:$true] %s39
      %42 = dma.hbm_to_vmem [thread:$0]  %s38, 1024, %s40, [#allocation6]
    $region9: #{tpu_custom_call.1} parent=1 // pred_fallthru
      _
    // Predicated region
    $region10: #{tpu_custom_call.1} parent=1 // pred_check
      _
    $region11: #{tpu_custom_call.1} parent=1 // pred_check_branch
      %44 = sbr.rel (0) target = $region13
    $region12: #{tpu_custom_call.1} parent=1 // pred_region
      %46 = dma.done [#allocation4], 1024
    $region13: #{tpu_custom_call.1} parent=1 // pred_fallthru
      _
    // Predicated region
    $region14: #{tpu_custom_call.1} parent=1 // pred_check
      _
    $region15: #{tpu_custom_call.1} parent=1 // pred_check_branch
      %48 = sbr.rel (0) target = $region17
    $region16: #{tpu_custom_call.1} parent=1 // pred_region
      %50 = dma.done [#allocation6], 1024
    $region17: #{tpu_custom_call.1} parent=1 // pred_fallthru
      _
    %s51 = sadd.s32 0, 0
    %p52 = scmp.lt.s32.totalorder %s51, 0
    %s53 = scalar_select %p52, %s51, 0
    %s54 = smul.u32 8, %s53
    %s55 = sadd.s32 0, 0
    %p56 = scmp.lt.s32.totalorder %s55, 0
    %s57 = scalar_select %p56, %s55, 0
    %s58 = smul.u32 8, %s57
    %p59 = scmp.eq.s32.totalorder 0, 0
    // Predicated region
    $region18: #{tpu_custom_call.1} parent=1 // pred_check
      %p60 = pneg %p59
    $region19: #{tpu_custom_call.1} parent=1 // pred_check_branch
      %62 = sbr.rel (%p60) target = $region21
    $region20: #{tpu_custom_call.1} parent=1 // pred_region
      %63 = vst [vmem:[#allocation2] sm:$0x3f] 0.0
      %64 = vst [vmem:[#allocation2 + $0x8] sm:$0x3f] 0.0
      %65 = vst [vmem:[#allocation2 + $0x10] sm:$0x3f] 0.0
      %66 = vst [vmem:[#allocation2 + $0x18] sm:$0x3f] 0.0
    $region21: #{tpu_custom_call.1} parent=1 // pred_fallthru
      _
    %v67 = vld [vmem:[#allocation3] sm:$0x3f]
    %v68 = vld [vmem:[#allocation3 + $0x8] sm:$0x3f]
    %v69 = vld [vmem:[#allocation3 + $0x10] sm:$0x3f]
    %v70 = vld [vmem:[#allocation3 + $0x18] sm:$0x3f]
    %v71 = vld [vmem:[#allocation5] sm:$0x3f]
    %v72 = vld [vmem:[#allocation5 + $0x8] sm:$0x3f]
    %v73 = vld [vmem:[#allocation5 + $0x10] sm:$0x3f]
    %v74 = vld [vmem:[#allocation5 + $0x18] sm:$0x3f]
    %v75 = vmax.f32 %v67, 0.0
    %v76 = vmax.f32 %v68, 0.0
    %v77 = vmax.f32 %v69, 0.0
    %v78 = vmax.f32 %v70, 0.0
    %v79 = vmul.f32 %v67, %v71
    %v80 = vmul.f32 %v68, %v72
    %v81 = vmul.f32 %v69, %v73
    %v82 = vmul.f32 %v70, %v74
    %v83 = vsub.f32 %v75, %v79
    %v84 = vsub.f32 %v76, %v80
    %v85 = vsub.f32 %v77, %v81
    %v86 = vsub.f32 %v78, %v82
    %v87 = vand.u32 2147483647, %v67
    %v88 = vand.u32 2147483647, %v68
    %v89 = vand.u32 2147483647, %v69
    %v90 = vand.u32 2147483647, %v70
    %v91 = vsub.f32 0.0, %v87
    %v92 = vsub.f32 0.0, %v88
    %v93 = vsub.f32 0.0, %v89
    %v94 = vsub.f32 0.0, %v90
    %v95 = vmul.f32 %v91, 1.442695
    %v96 = vpow.pop %v95
    %v97 = vmul.f32 %v92, 1.442695
    %v98 = vpow.pop %v97
    %v99 = vmul.f32 %v93, 1.442695
    %v100 = vpow.pop %v99
    %v101 = vmul.f32 %v94, 1.442695
    %v102 = vpow.pop %v101
    %v103 = vadd.f32 %v96, 1.0
    %v104 = vlog2.pop %v103
    %v105 = vmul.f32 %v104, 0.6931472
    %v106 = vmul.f32 -0.5, %v96
    %v107 = vadd.f32 %v106, 1.0
    %v108 = vmul.f32 %v107, %v96
    %v109 = vand.u32 2147483647, %v96
    %vm110 = vcmp.lt.f32.partialorder %v109, 0.0004427343
    %v111 = vsel %vm110, %v108, %v105
    %v112 = vadd.f32 %v98, 1.0
    %v113 = vlog2.pop %v112
    %v114 = vmul.f32 %v113, 0.6931472
    %v115 = vmul.f32 -0.5, %v98
    %v116 = vadd.f32 %v115, 1.0
    %v117 = vmul.f32 %v116, %v98
    %v118 = vand.u32 2147483647, %v98
    %vm119 = vcmp.lt.f32.partialorder %v118, 0.0004427343
    %v120 = vsel %vm119, %v117, %v114
    %v121 = vadd.f32 %v100, 1.0
    %v122 = vlog2.pop %v121
    %v123 = vmul.f32 %v122, 0.6931472
    %v124 = vmul.f32 -0.5, %v100
    %v125 = vadd.f32 %v124, 1.0
    %v126 = vmul.f32 %v125, %v100
    %v127 = vand.u32 2147483647, %v100
    %vm128 = vcmp.lt.f32.partialorder %v127, 0.0004427343
    %v129 = vsel %vm128, %v126, %v123
    %v130 = vadd.f32 %v102, 1.0
    %v131 = vlog2.pop %v130
    %v132 = vmul.f32 %v131, 0.6931472
    %v133 = vmul.f32 -0.5, %v102
    %v134 = vadd.f32 %v133, 1.0
    %v135 = vmul.f32 %v134, %v102
    %v136 = vand.u32 2147483647, %v102
    %vm137 = vcmp.lt.f32.partialorder %v136, 0.0004427343
    %v138 = vsel %vm137, %v135, %v132
    %v139 = vadd.f32 %v83, %v111
    %v140 = vadd.f32 %v84, %v120
    %v141 = vadd.f32 %v85, %v129
    %v142 = vadd.f32 %v86, %v138
    %v143 = vadd.f32 %v139, 0.0
    %v144 = vadd.f32 %v140, 0.0
    %v145 = vadd.f32 %v141, 0.0
    %v146 = vadd.f32 %v142, 0.0
    %s147 = scalar_lea.vmem [#allocation3], 32
    %v148 = vld [vmem:[%s147] sm:$0x3f]
    %v149 = vld [vmem:[%s147 + $0x8] sm:$0x3f]
    %v150 = vld [vmem:[%s147 + $0x10] sm:$0x3f]
    %v151 = vld [vmem:[%s147 + $0x18] sm:$0x3f]
    %s152 = scalar_lea.vmem [#allocation5], 32
    %v153 = vld [vmem:[%s152] sm:$0x3f]
    %v154 = vld [vmem:[%s152 + $0x8] sm:$0x3f]
    %v155 = vld [vmem:[%s152 + $0x10] sm:$0x3f]
    %v156 = vld [vmem:[%s152 + $0x18] sm:$0x3f]
    %v157 = vmax.f32 %v148, 0.0
    %v158 = vmax.f32 %v149, 0.0
    %v159 = vmax.f32 %v150, 0.0
    %v160 = vmax.f32 %v151, 0.0
    %v161 = vmul.f32 %v148, %v153
    %v162 = vmul.f32 %v149, %v154
    %v163 = vmul.f32 %v150, %v155
    %v164 = vmul.f32 %v151, %v156
    %v165 = vsub.f32 %v157, %v161
    %v166 = vsub.f32 %v158, %v162
    %v167 = vsub.f32 %v159, %v163
    %v168 = vsub.f32 %v160, %v164
    %v169 = vand.u32 2147483647, %v148
    %v170 = vand.u32 2147483647, %v149
    %v171 = vand.u32 2147483647, %v150
    %v172 = vand.u32 2147483647, %v151
    %v173 = vsub.f32 0.0, %v169
    %v174 = vsub.f32 0.0, %v170
    %v175 = vsub.f32 0.0, %v171
    %v176 = vsub.f32 0.0, %v172
    %v177 = vmul.f32 %v173, 1.442695
    %v178 = vpow.pop %v177
    %v179 = vmul.f32 %v174, 1.442695
    %v180 = vpow.pop %v179
    %v181 = vmul.f32 %v175, 1.442695
    %v182 = vpow.pop %v181
    %v183 = vmul.f32 %v176, 1.442695
    %v184 = vpow.pop %v183
    %v185 = vadd.f32 %v178, 1.0
    %v186 = vlog2.pop %v185
    %v187 = vmul.f32 %v186, 0.6931472
    %v188 = vmul.f32 -0.5, %v178
    %v189 = vadd.f32 %v188, 1.0
    %v190 = vmul.f32 %v189, %v178
    %v191 = vand.u32 2147483647, %v178
    %vm192 = vcmp.lt.f32.partialorder %v191, 0.0004427343
    %v193 = vsel %vm192, %v190, %v187
    %v194 = vadd.f32 %v180, 1.0
    %v195 = vlog2.pop %v194
    %v196 = vmul.f32 %v195, 0.6931472
    %v197 = vmul.f32 -0.5, %v180
    %v198 = vadd.f32 %v197, 1.0
    %v199 = vmul.f32 %v198, %v180
    %v200 = vand.u32 2147483647, %v180
    %vm201 = vcmp.lt.f32.partialorder %v200, 0.0004427343
    %v202 = vsel %vm201, %v199, %v196
    %v203 = vadd.f32 %v182, 1.0
    %v204 = vlog2.pop %v203
    %v205 = vmul.f32 %v204, 0.6931472
    %v206 = vmul.f32 -0.5, %v182
    %v207 = vadd.f32 %v206, 1.0
    %v208 = vmul.f32 %v207, %v182
    %v209 = vand.u32 2147483647, %v182
    %vm210 = vcmp.lt.f32.partialorder %v209, 0.0004427343
    %v211 = vsel %vm210, %v208, %v205
    %v212 = vadd.f32 %v184, 1.0
    %v213 = vlog2.pop %v212
    %v214 = vmul.f32 %v213, 0.6931472
    %v215 = vmul.f32 -0.5, %v184
    %v216 = vadd.f32 %v215, 1.0
    %v217 = vmul.f32 %v216, %v184
    %v218 = vand.u32 2147483647, %v184
    %vm219 = vcmp.lt.f32.partialorder %v218, 0.0004427343
    %v220 = vsel %vm219, %v217, %v214
    %v221 = vadd.f32 %v165, %v193
    %v222 = vadd.f32 %v166, %v202
    %v223 = vadd.f32 %v167, %v211
    %v224 = vadd.f32 %v168, %v220
    %v225 = vadd.f32 %v143, %v221
    %v226 = vadd.f32 %v144, %v222
    %v227 = vadd.f32 %v145, %v223
    %v228 = vadd.f32 %v146, %v224
    %v229 = vld [vmem:[#allocation2] sm:$0x3f]
    %v230 = vld [vmem:[#allocation2 + $0x8] sm:$0x3f]
    %v231 = vld [vmem:[#allocation2 + $0x10] sm:$0x3f]
    %v232 = vld [vmem:[#allocation2 + $0x18] sm:$0x3f]
    %v233 = vadd.f32 %v229, %v225
    %v234 = vadd.f32 %v230, %v226
    %v235 = vadd.f32 %v231, %v227
    %v236 = vadd.f32 %v232, %v228
    %237 = vst [vmem:[#allocation2] sm:$0x3f] %v233
    %238 = vst [vmem:[#allocation2 + $0x8] sm:$0x3f] %v234
    %239 = vst [vmem:[#allocation2 + $0x10] sm:$0x3f] %v235
    %240 = vst [vmem:[#allocation2 + $0x18] sm:$0x3f] %v236
    // Predicated region
    $region22: #{tpu_custom_call.1} parent=1 // pred_check
      %p241 = pneg %p59
    $region23: #{tpu_custom_call.1} parent=1 // pred_check_branch
      %243 = sbr.rel (%p241) target = $region25
    $region24: #{tpu_custom_call.1} parent=1 // pred_region
      %v244 = vld [vmem:[#allocation2] sm:$0x3f]
      %v245 = vld [vmem:[#allocation2 + $0x8] sm:$0x3f]
      %v246 = vld [vmem:[#allocation2 + $0x10] sm:$0x3f]
      %v247 = vld [vmem:[#allocation2 + $0x18] sm:$0x3f]
      %248 = vst [vmem:[%s2] sm:$0x3f] %v244
      %249 = vst [vmem:[%s2 + $0x8] sm:$0x3f] %v245
      %250 = vst [vmem:[%s2 + $0x10] sm:$0x3f] %v246
      %251 = vst [vmem:[%s2 + $0x18] sm:$0x3f] %v247
    $region25: #{tpu_custom_call.1} parent=1 // pred_fallthru
      _
    // Predicated region
    $region26: #{tpu_custom_call.1} parent=1 // pred_check
      _
    $region27: #{tpu_custom_call.1} parent=1 // pred_check_branch
      %253 = sbr.rel (0) target = $region29
    $region28: #{tpu_custom_call.1} parent=1 // pred_region
      _
    $region29: #{tpu_custom_call.1} parent=1 // pred_fallthru
      _
    // Predicated region
    $region30: #{tpu_custom_call.1} parent=1 // pred_check
      _
    $region31: #{tpu_custom_call.1} parent=1 // pred_check_branch
      %255 = sbr.rel (0) target = $region33
    $region32: #{tpu_custom_call.1} parent=1 // pred_region
      _
    $region33: #{tpu_custom_call.1} parent=1 // pred_fallthru
      _
    %256 = vsyncpa [#allocation4], 1
    %257 = vsyncpa [#allocation6], 1

</llo_original>
